<compile_context>
chip_gen: v6e
topology: v6e:2x2x1
jax: 0.10.0
libtpu: 0.0.40
codegen_flags: <defaults>
</compile_context>

<pallas_src>
import functools

import jax
import jax.numpy as jnp
from jax.experimental import pallas as pl
from jax.experimental.pallas import tpu as pltpu


def _round_up(x, m):
    return (x + m - 1) // m * m


def _composite_field_kernel(x_ref, w_ref, b_ref,
                            cls_ref, reg_ref, sp_ref, sc_ref,
                            *, n_fields, fp, rp, dilation):
    # x_ref:   (1, Cin_p, T)   input slab, spatial on the lane axis (bf16)
    # w_ref:   (C_tot, Cin_p)  fused head weights, rows padded per head:
    #                          [class Fp | reg Rp | spread Fp | scale Fp]
    # b_ref:   (C_tot, 1)      fused bias (f32; padded rows are zero)
    # cls_ref: (1, F, T)   reg_ref: (1, 2F, T)   sp_ref/sc_ref: (1, F, T)
    f = n_fields
    x = x_ref[0]                                                   # (Cin_p, T)
    y = jnp.dot(w_ref[...], x, preferred_element_type=jnp.float32) + b_ref[...]

    # class head: sigmoid (module in eval mode)
    cls_ref[0] = jax.nn.sigmoid(y[0:fp])[:f].astype(cls_ref.dtype)

    # regression head: * dilation (static; skip the multiply when it is 1)
    reg = y[fp:fp + rp]
    if dilation != 1.0:
        reg = reg * dilation
    reg_ref[0] = reg[:2 * f].astype(reg_ref.dtype)

    # spread head: leaky_relu(y + 2, 0.01) - 2
    sp = y[fp + rp:2 * fp + rp] + 2.0
    sp = jnp.where(sp >= 0.0, sp, 0.01 * sp) - 2.0
    sp_ref[0] = sp[:f].astype(sp_ref.dtype)

    # scale head: relu
    sc_ref[0] = jnp.maximum(y[2 * fp + rp:3 * fp + rp], 0.0)[:f].astype(sc_ref.dtype)


def _vmem_caps():
    """(physical_vmem_bytes_per_core, working_budget). ~48 MiB budget on v7x,
    ~96 MiB on v5e/v6e; conservative 64 MiB physical if the query fails."""
    phys = 64 << 20
    try:
        phys = int(getattr(pltpu.get_tpu_info(), "vmem_capacity_bytes", phys))
    except Exception:
        pass
    return phys, (phys * 3) // 4


def _choose_tile_hw(hw_p, per_lane_bytes, budget_bytes, n_batch):
    """Largest multiple-of-128 divisor of hw_p whose per-step footprint fits
    the VMEM budget; then keep the total parallel step count even when cheap
    (v7x has 2 TensorCores that share the 'parallel' grid)."""
    max_lanes = max(128, budget_bytes // max(per_lane_bytes, 1))
    limit = min(hw_p, max_lanes)
    t_hw = 128
    d = 128
    while d <= limit:
        if hw_p % d == 0:
            t_hw = d
        d += 128
    if (n_batch * (hw_p // t_hw)) % 2 == 1 and t_hw % 256 == 0:
        t_hw //= 2
    return t_hw


def pack_params(per_head_params, *, compute_dtype=jnp.bfloat16):
    """Pack per-head 1x1-conv params into the fused, sublane-padded layout.

    per_head_params: ((w_cls, b_cls), (w_reg, b_reg), (w_sp, b_sp), (w_sc, b_sc))
      w_cls/w_sp/w_sc: (F, Cin), w_reg: (2F, Cin), biases: (rows,).
      (PyTorch Conv2d weights (Cout, Cin, 1, 1) map to (Cout, Cin) by squeeze.)
    """
    (w_cls, b_cls), (w_reg, b_reg), (w_sp, b_sp), (w_sc, b_sc) = per_head_params
    f, cin = w_cls.shape
    fp = _round_up(f, 8)
    rp = _round_up(2 * f, 8)
    cin_p = _round_up(cin, 8)

    def pad_w(w, rows_p):
        return jnp.pad(w, ((0, rows_p - w.shape[0]), (0, cin_p - w.shape[1])))

    def pad_b(b, rows_p):
        return jnp.pad(b, (0, rows_p - b.shape[0]))

    w_all = jnp.concatenate(
        [pad_w(w_cls, fp), pad_w(w_reg, rp), pad_w(w_sp, fp), pad_w(w_sc, fp)],
        axis=0).astype(compute_dtype)
    b_all = jnp.concatenate(
        [pad_b(b_cls, fp), pad_b(b_reg, rp), pad_b(b_sp, fp), pad_b(b_sc, fp)],
        axis=0)[:, None].astype(jnp.float32)
    meta = dict(n_fields=f, fp=fp, rp=rp, cin=cin, cin_p=cin_p)
    return w_all, b_all, meta


def composite_field_forward(x_nchw, packed_params, *, dilation=1,
                            compute_dtype=jnp.bfloat16, out_dtype=jnp.float32):
    """x_nchw: (N, Cin, H, W).  Returns [classes, regs, regs_spread, scales]."""
    w_all, b_all, meta = packed_params
    f, fp, rp = meta["n_fields"], meta["fp"], meta["rp"]
    cin, cin_p = meta["cin"], meta["cin_p"]
    c_tot = 3 * fp + rp
    n, cin_x, h, w = x_nchw.shape
    assert cin_x == cin
    hw = h * w
    hw_p = _round_up(hw, 128)

    # NCHW -> (N, Cin, H*W) is a free contiguous view.  Pad Cin to a multiple
    # of 8 (full sublane utilization) and H*W to a multiple of 128 (lane-dense
    # unmasked stores), and cast to the bf16 matmul dtype.  With an aligned,
    # already-bf16 backbone output all of this is a no-op.
    x3 = x_nchw.reshape(n, cin, hw)
    if cin_p != cin or hw_p != hw:
        x3 = jnp.pad(x3, ((0, 0), (0, cin_p - cin), (0, hw_p - hw)))
    x3 = x3.astype(compute_dtype)

    bytes_x = jnp.dtype(compute_dtype).itemsize
    bytes_o = jnp.dtype(out_dtype).itemsize
    # Per-lane VMEM footprint of one grid step: double-buffered x tile,
    # double-buffered 4 output tiles, f32 matmul accumulator + one head temp.
    per_lane = (2 * cin_p * bytes_x
                + 2 * 5 * f * bytes_o
                + c_tot * 4
                + rp * 4)
    phys_vmem, budget = _vmem_caps()
    t_hw = _choose_tile_hw(hw_p, per_lane, budget, n)

    w_bytes = c_tot * cin_p * bytes_x + c_tot * 4
    need = per_lane * t_hw + 2 * w_bytes + (2 << 20)
    vmem_limit = int(min(max(need, budget), phys_vmem))

    grid = (n, hw_p // t_hw)
    kernel = functools.partial(_composite_field_kernel,
                               n_fields=f, fp=fp, rp=rp, dilation=float(dilation))

    out_shapes = (
        jax.ShapeDtypeStruct((n, f, hw_p), out_dtype),        # class
        jax.ShapeDtypeStruct((n, 2 * f, hw_p), out_dtype),    # reg
        jax.ShapeDtypeStruct((n, f, hw_p), out_dtype),        # spread
        jax.ShapeDtypeStruct((n, f, hw_p), out_dtype),        # scale
    )
    out_specs = (
        pl.BlockSpec((1, f, t_hw), lambda i, j: (i, 0, j)),
        pl.BlockSpec((1, 2 * f, t_hw), lambda i, j: (i, 0, j)),
        pl.BlockSpec((1, f, t_hw), lambda i, j: (i, 0, j)),
        pl.BlockSpec((1, f, t_hw), lambda i, j: (i, 0, j)),
    )

    cls, reg, sp, sc = pl.pallas_call(
        kernel,
        out_shape=out_shapes,
        grid_spec=pltpu.PrefetchScalarGridSpec(
            num_scalar_prefetch=0,
            grid=grid,
            in_specs=[
                pl.BlockSpec((1, cin_p, t_hw), lambda i, j: (i, 0, j)),  # x slab
                pl.BlockSpec((c_tot, cin_p), lambda i, j: (0, 0)),       # fused W (resident)
                pl.BlockSpec((c_tot, 1), lambda i, j: (0, 0)),           # fused bias (resident)
            ],
            out_specs=out_specs,
        ),
        compiler_params=pltpu.CompilerParams(
            dimension_semantics=("parallel", "parallel"),
            vmem_limit_bytes=vmem_limit),
    )(x3, w_all, b_all)

    if hw_p != hw:
        cls = cls[..., :hw]
        reg = reg[..., :hw]
        sp = sp[..., :hw]
        sc = sc[..., :hw]

    classes_x = cls.reshape(n, f, h, w)                 # (N, F, H, W)
    regs_x = reg.reshape(n, f, 2, h, w)                 # free contiguous view
    regs_x_spread = sp.reshape(n, f, h, w)
    scales_x = sc.reshape(n, f, h, w)

    # forward() returns classes_x + regs_x + regs_x_spread + scales_x
    return [classes_x, regs_x, regs_x_spread, scales_x]


def init_params(key, in_features, n_fields, *, compute_dtype=jnp.bfloat16):
    """Deterministic synthetic per-head 1x1-conv params (PyTorch Conv2d-style
    uniform init), packed into the fused, sublane-padded kernel layout."""
    keys = jax.random.split(key, 8)
    bound = float(in_features) ** -0.5

    def head(kw, kb, rows):
        w = jax.random.uniform(kw, (rows, in_features), jnp.float32, -1.0, 1.0) * bound
        b = jax.random.uniform(kb, (rows,), jnp.float32, -1.0, 1.0) * bound
        return w, b

    per_head = (head(keys[0], keys[1], n_fields),        # class conv
                head(keys[2], keys[3], 2 * n_fields),    # reg conv
                head(keys[4], keys[5], n_fields),        # reg spread conv
                head(keys[6], keys[7], n_fields))        # scale conv
    return pack_params(per_head, compute_dtype=compute_dtype)


if __name__ == "__main__":
    # head_name='pif4': n_fields=4, n_confidences=1, n_vectors=1, n_scales=1,
    # kernel_size=1, padding=0, dilation=1, quad=0, dropout p=0.0 (identity).
    N, CIN, H, W = 2, 4, 16, 16
    N_FIELDS = 4
    DILATION = 1

    key = jax.random.PRNGKey(0)
    k_x, k_p = jax.random.split(key)
    x = jax.random.normal(k_x, (N, CIN, H, W), jnp.float32)
    params = init_params(k_p, CIN, N_FIELDS)

    fwd = jax.jit(lambda xx: composite_field_forward(xx, params, dilation=DILATION))
    outs = fwd(x)
    outs = jax.block_until_ready(outs)

    assert outs[0].shape == (N, N_FIELDS, H, W)
    assert outs[1].shape == (N, N_FIELDS, 2, H, W)
    assert outs[2].shape == (N, N_FIELDS, H, W)
    assert outs[3].shape == (N, N_FIELDS, H, W)
    print("KERNEL_OK")
</pallas_src>

<mosaic_0001>
module attributes {stable_mosaic.version = 11 : i64} {
  func.func @_composite_field_kernel(%arg0: i32, %arg1: i32, %arg2: memref<1x8x256xbf16, #tpu.memory_space<vmem>>, %arg3: memref<32x8xbf16, #tpu.memory_space<vmem>>, %arg4: memref<32x1xf32, #tpu.memory_space<vmem>>, %arg5: memref<1x4x256xf32, #tpu.memory_space<vmem>>, %arg6: memref<1x8x256xf32, #tpu.memory_space<vmem>>, %arg7: memref<1x4x256xf32, #tpu.memory_space<vmem>>, %arg8: memref<1x4x256xf32, #tpu.memory_space<vmem>>) attributes {dimension_semantics = [#tpu.dimension_semantics<parallel>, #tpu.dimension_semantics<parallel>], iteration_bounds = array<i64: 2, 1>, scalar_prefetch = 0 : i64, scratch_operands = 0 : i64, tpu.core_type = #tpu.core_type<tc>, window_params = [{transform_indices = @transform_0, window_bounds = array<i64: 1, 8, 256>}, {pipeline_mode = #tpu.pipeline_mode<synchronous>, transform_indices = @transform_1, window_bounds = array<i64: 32, 8>}, {pipeline_mode = #tpu.pipeline_mode<synchronous>, transform_indices = @transform_2, window_bounds = array<i64: 32, 1>}, {transform_indices = @transform_3, window_bounds = array<i64: 1, 4, 256>}, {transform_indices = @transform_4, window_bounds = array<i64: 1, 8, 256>}, {transform_indices = @transform_5, window_bounds = array<i64: 1, 4, 256>}, {transform_indices = @transform_6, window_bounds = array<i64: 1, 4, 256>}]} {
    %c0 = arith.constant 0 : index
    %c0_0 = arith.constant 0 : index
    %c0_1 = arith.constant 0 : index
    %0 = vector.load %arg2[%c0, %c0_0, %c0_1] : memref<1x8x256xbf16, #tpu.memory_space<vmem>>, vector<1x8x256xbf16>
    %1 = vector.shape_cast %0 : vector<1x8x256xbf16> to vector<8x256xbf16>
    %c0_2 = arith.constant 0 : index
    %c0_3 = arith.constant 0 : index
    %2 = vector.load %arg3[%c0_2, %c0_3] : memref<32x8xbf16, #tpu.memory_space<vmem>>, vector<32x8xbf16>
    %cst = arith.constant dense<0.000000e+00> : vector<32x256xf32>
    %3 = tpu.matmul %2, %1, %cst {dimension_numbers = #tpu.dot_dimension_numbers<[1], [0], [0], [1], [0, 0, 1, 1], [], []>} : vector<32x8xbf16>, vector<8x256xbf16>, vector<32x256xf32> -> vector<32x256xf32>
    %c0_4 = arith.constant 0 : index
    %c0_5 = arith.constant 0 : index
    %4 = vector.load %arg4[%c0_4, %c0_5] : memref<32x1xf32, #tpu.memory_space<vmem>>, vector<32x1xf32>
    %5 = vector.broadcast %4 : vector<32x1xf32> to vector<32x256xf32>
    %6 = arith.addf %3, %5 : vector<32x256xf32>
    %7 = vector.extract_strided_slice %6 {offsets = [0, 0], sizes = [8, 256], strides = [1, 1]} : vector<32x256xf32> to vector<8x256xf32>
    %8 = arith.negf %7 : vector<8x256xf32>
    %9 = math.exp %8 : vector<8x256xf32>
    %cst_6 = arith.constant 1.000000e+00 : f32
    %10 = vector.broadcast %cst_6 : f32 to vector<8x256xf32>
    %11 = arith.addf %10, %9 : vector<8x256xf32>
    %12 = arith.divf %10, %11 : vector<8x256xf32>
    %13 = vector.extract_strided_slice %12 {offsets = [0, 0], sizes = [4, 256], strides = [1, 1]} : vector<8x256xf32> to vector<4x256xf32>
    %c0_7 = arith.constant 0 : index
    %c0_8 = arith.constant 0 : index
    %c0_9 = arith.constant 0 : index
    %14 = vector.load %arg5[%c0_7, %c0_8, %c0_9] : memref<1x4x256xf32, #tpu.memory_space<vmem>>, vector<1x4x256xf32>
    %15 = vector.shape_cast %14 : vector<1x4x256xf32> to vector<4x256xf32>
    %16 = vector.shape_cast %13 : vector<4x256xf32> to vector<1x4x256xf32>
    tpu.vector_store %arg5[%c0_7, %c0_8, %c0_9], %16 {strides = array<i32>} : memref<1x4x256xf32, #tpu.memory_space<vmem>>, vector<1x4x256xf32>,
    %17 = vector.extract_strided_slice %6 {offsets = [8, 0], sizes = [8, 256], strides = [1, 1]} : vector<32x256xf32> to vector<8x256xf32>
    %c0_10 = arith.constant 0 : index
    %c0_11 = arith.constant 0 : index
    %c0_12 = arith.constant 0 : index
    %18 = vector.load %arg6[%c0_10, %c0_11, %c0_12] : memref<1x8x256xf32, #tpu.memory_space<vmem>>, vector<1x8x256xf32>
    %19 = vector.shape_cast %18 : vector<1x8x256xf32> to vector<8x256xf32>
    %20 = vector.shape_cast %17 : vector<8x256xf32> to vector<1x8x256xf32>
    tpu.vector_store %arg6[%c0_10, %c0_11, %c0_12], %20 {strides = array<i32>} : memref<1x8x256xf32, #tpu.memory_space<vmem>>, vector<1x8x256xf32>,
    %21 = vector.extract_strided_slice %6 {offsets = [16, 0], sizes = [8, 256], strides = [1, 1]} : vector<32x256xf32> to vector<8x256xf32>
    %cst_13 = arith.constant 2.000000e+00 : f32
    %22 = vector.broadcast %cst_13 : f32 to vector<8x256xf32>
    %23 = arith.addf %21, %22 : vector<8x256xf32>
    %cst_14 = arith.constant 0.000000e+00 : f32
    %24 = vector.broadcast %cst_14 : f32 to vector<8x256xf32>
    %25 = arith.cmpf oge, %23, %24 : vector<8x256xf32>
    %cst_15 = arith.constant 0.00999999977 : f32
    %26 = vector.broadcast %cst_15 : f32 to vector<8x256xf32>
    %27 = arith.mulf %26, %23 : vector<8x256xf32>
    %28 = arith.select %25, %23, %27 : vector<8x256xi1>, vector<8x256xf32>
    %cst_16 = arith.constant 2.000000e+00 : f32
    %29 = vector.broadcast %cst_16 : f32 to vector<8x256xf32>
    %30 = arith.subf %28, %29 : vector<8x256xf32>
    %31 = vector.extract_strided_slice %30 {offsets = [0, 0], sizes = [4, 256], strides = [1, 1]} : vector<8x256xf32> to vector<4x256xf32>
    %c0_17 = arith.constant 0 : index
    %c0_18 = arith.constant 0 : index
    %c0_19 = arith.constant 0 : index
    %32 = vector.load %arg7[%c0_17, %c0_18, %c0_19] : memref<1x4x256xf32, #tpu.memory_space<vmem>>, vector<1x4x256xf32>
    %33 = vector.shape_cast %32 : vector<1x4x256xf32> to vector<4x256xf32>
    %34 = vector.shape_cast %31 : vector<4x256xf32> to vector<1x4x256xf32>
    tpu.vector_store %arg7[%c0_17, %c0_18, %c0_19], %34 {strides = array<i32>} : memref<1x4x256xf32, #tpu.memory_space<vmem>>, vector<1x4x256xf32>,
    %35 = vector.extract_strided_slice %6 {offsets = [24, 0], sizes = [8, 256], strides = [1, 1]} : vector<32x256xf32> to vector<8x256xf32>
    %cst_20 = arith.constant 0.000000e+00 : f32
    %36 = vector.broadcast %cst_20 : f32 to vector<8x256xf32>
    %37 = arith.maximumf %35, %36 : vector<8x256xf32>
    %38 = vector.extract_strided_slice %37 {offsets = [0, 0], sizes = [4, 256], strides = [1, 1]} : vector<8x256xf32> to vector<4x256xf32>
    %c0_21 = arith.constant 0 : index
    %c0_22 = arith.constant 0 : index
    %c0_23 = arith.constant 0 : index
    %39 = vector.load %arg8[%c0_21, %c0_22, %c0_23] : memref<1x4x256xf32, #tpu.memory_space<vmem>>, vector<1x4x256xf32>
    %40 = vector.shape_cast %39 : vector<1x4x256xf32> to vector<4x256xf32>
    %41 = vector.shape_cast %38 : vector<4x256xf32> to vector<1x4x256xf32>
    tpu.vector_store %arg8[%c0_21, %c0_22, %c0_23], %41 {strides = array<i32>} : memref<1x4x256xf32, #tpu.memory_space<vmem>>, vector<1x4x256xf32>,
    return
  }
  func.func @transform_0(%arg0: i32, %arg1: i32) -> (i32, i32, i32) {
    %c0_i32 = arith.constant 0 : i32
    %c0_i32_0 = arith.constant 0 : i32
    return %arg0, %c0_i32, %arg1 : i32, i32, i32
  }
  func.func @transform_1(%arg0: i32, %arg1: i32) -> (i32, i32) {
    %c0_i32 = arith.constant 0 : i32
    %c0_i32_0 = arith.constant 0 : i32
    %c0_i32_1 = arith.constant 0 : i32
    return %c0_i32, %c0_i32_0 : i32, i32
  }
  func.func @transform_2(%arg0: i32, %arg1: i32) -> (i32, i32) {
    %c0_i32 = arith.constant 0 : i32
    %c0_i32_0 = arith.constant 0 : i32
    %c0_i32_1 = arith.constant 0 : i32
    return %c0_i32, %c0_i32_0 : i32, i32
  }
  func.func @transform_3(%arg0: i32, %arg1: i32) -> (i32, i32, i32) {
    %c0_i32 = arith.constant 0 : i32
    %c0_i32_0 = arith.constant 0 : i32
    return %arg0, %c0_i32, %arg1 : i32, i32, i32
  }
  func.func @transform_4(%arg0: i32, %arg1: i32) -> (i32, i32, i32) {
    %c0_i32 = arith.constant 0 : i32
    %c0_i32_0 = arith.constant 0 : i32
    return %arg0, %c0_i32, %arg1 : i32, i32, i32
  }
  func.func @transform_5(%arg0: i32, %arg1: i32) -> (i32, i32, i32) {
    %c0_i32 = arith.constant 0 : i32
    %c0_i32_0 = arith.constant 0 : i32
    return %arg0, %c0_i32, %arg1 : i32, i32, i32
  }
  func.func @transform_6(%arg0: i32, %arg1: i32) -> (i32, i32, i32) {
    %c0_i32 = arith.constant 0 : i32
    %c0_i32_0 = arith.constant 0 : i32
    return %arg0, %c0_i32, %arg1 : i32, i32, i32
  }
}

</mosaic_0001>

<llo_original>
// kernel: _lambda_.1
$region0: #{_lambda_.1}
  #allocation0 [shape = 'u32[]', space=smem, size = 0x4, offset = 0x4, fixed_abs, tag = 'smem constant byte address 0x4 - core index']
  #allocation1 [shape = 'u32[144,128]{1,0:T(1,128)}', space=vmem, size = 0x12000, scoped, tag = 'internal scratch']
  %s0 = inlined_call_operand.vmem [shape: bf16[2,8,256], index: 0, kind: input, shape index: {}]
  %s1 = inlined_call_operand.vmem [shape: bf16[32,8], index: 1, kind: input, shape index: {}]
  %s2 = inlined_call_operand.vmem [shape: f32[32,1], index: 2, kind: input, shape index: {}]
  %s3 = inlined_call_operand.vmem [shape: f32[2,4,256], index: 3, kind: output, shape index: {0}]
  %s4 = inlined_call_operand.vmem [shape: f32[2,8,256], index: 4, kind: output, shape index: {1}]
  %s5 = inlined_call_operand.vmem [shape: f32[2,4,256], index: 5, kind: output, shape index: {2}]
  %s6 = inlined_call_operand.vmem [shape: f32[2,4,256], index: 6, kind: output, shape index: {3}]
  %7 = xla_tuple %s3, %s4, %s5, %s6
  %s8 = sld [smem:[#allocation0]]
  $region69: #{_lambda_.1} parent=0
    _
  %s10 = ssub.s32 1, %s8
  %s11 = scalar_select 0, %s10, %s8
  loop: start=0, step=1, limit=4
  $region2: #{_lambda_.1} parent=0 // loop_pre_header
    _
  $region3: #{_lambda_.1} parent=0 // loop_header
    %s13 = sphi 0, %s17
    %p14 = scmp.ge.s32.totalorder %s13, 4
    %s20 = sphi 0, %s32
    %s21 = sphi 0, %s28
    %s22 = sphi 0, %s20
    %s23 = sphi 0, %s21
    %s24 = sphi 0, %s22
    %s25 = sphi 0, %s23
    %s37 = sphi 0, %s39
    %s40 = sphi 0, %s37
    %s41 = sphi 0, %s40
    %s57 = sphi 0, %s41
    %s61 = sphi 0, %s61
    %s63 = sphi 0, %s61
    %s64 = sphi 0, %s63
    %s78 = sphi 0, %s64
    %s82 = sphi 0, %s82
    %s84 = sphi 0, %s82
    %s85 = sphi 0, %s84
    %s99 = sphi 0, %s85
    %s107 = sphi 0, %s109
    %s110 = sphi 0, %s107
    %s111 = sphi 0, %s110
    %s127 = sphi 0, %s111
    %s135 = sphi 0, %s137
    %s138 = sphi 0, %s135
    %s139 = sphi 0, %s138
    %s155 = sphi 0, %s139
    %s163 = sphi 0, %s165
    %s166 = sphi 0, %s163
    %s167 = sphi 0, %s166
    %s183 = sphi 0, %s167
    %s191 = sphi 0, %s193
    %s194 = sphi 0, %s191
    %s195 = sphi 0, %s194
    %s211 = sphi 0, %s195
  $region4: #{_lambda_.1} parent=0 // loop_header_branch
    %16 = sbr.rel (%p14) target = $region8
  $region5: #{_lambda_.1} parent=0 // loop_body
    %s18 = ssub.s32 %s13, 1
    %s19 = ssub.s32 %s13, 2
    %s26 = sadd.s32 1, %s21
    %p27 = scmp.ge.s32.totalorder %s26, 1
    %s28 = scalar_select %p27, 0, %s26
    %s29 = sadd.s32 1, %s20
    %s30 = scalar_select %p27, %s29, %s20
    %p31 = scmp.ge.s32.totalorder %s30, 2
    %s32 = scalar_select %p31, 0, %s30
    %s33 = ssub.s32 %s20, %s32
    %s34 = ssub.s32 %s21, %s28
    %s35 = sor.u32 %s33, %s34
    %p36 = scmp.eq.s32.totalorder %s35, 0
    %s38 = sadd.s32 %s37, 1
    %s39 = scalar_select %p36, %s37, %s38
    %p42 = pneg %p36
    %p43 = scmp.eq.s32.totalorder %s13, 1
    %p44 = por %p42, %p43
    %p45 = scmp.ne.s32.totalorder %s37, %s40
    %p46 = scmp.eq.s32.totalorder %s13, 0
    %p47 = por %p45, %p46
    %p48 = scmp.ne.s32.totalorder %s37, %s40
    %p49 = scmp.eq.s32.totalorder %s18, 1
    %p50 = por %p48, %p49
    %p51 = scmp.ne.s32.totalorder %s40, %s41
    %p52 = scmp.eq.s32.totalorder %s18, 0
    %p53 = por %p51, %p52
    %p54 = scmp.ne.s32.totalorder %s40, %s41
    %p55 = scmp.eq.s32.totalorder %s19, 1
    %p56 = por %p54, %p55
    %p58 = scmp.ne.s32.totalorder %s41, %s57
    %p59 = scmp.eq.s32.totalorder %s19, 0
    %p60 = por %p58, %p59
    %s62 = sadd.s32 %s61, 1
    %p65 = scmp.eq.s32.totalorder %s13, 1
    %p66 = scmp.ne.s32.totalorder %s61, %s63
    %p67 = scmp.eq.s32.totalorder %s13, 0
    %p68 = por %p66, %p67
    %p69 = scmp.ne.s32.totalorder %s61, %s63
    %p70 = scmp.eq.s32.totalorder %s18, 1
    %p71 = por %p69, %p70
    %p72 = scmp.ne.s32.totalorder %s63, %s64
    %p73 = scmp.eq.s32.totalorder %s18, 0
    %p74 = por %p72, %p73
    %p75 = scmp.ne.s32.totalorder %s63, %s64
    %p76 = scmp.eq.s32.totalorder %s19, 1
    %p77 = por %p75, %p76
    %p79 = scmp.ne.s32.totalorder %s64, %s78
    %p80 = scmp.eq.s32.totalorder %s19, 0
    %p81 = por %p79, %p80
    %s83 = sadd.s32 %s82, 1
    %p86 = scmp.eq.s32.totalorder %s13, 1
    %p87 = scmp.ne.s32.totalorder %s82, %s84
    %p88 = scmp.eq.s32.totalorder %s13, 0
    %p89 = por %p87, %p88
    %p90 = scmp.ne.s32.totalorder %s82, %s84
    %p91 = scmp.eq.s32.totalorder %s18, 1
    %p92 = por %p90, %p91
    %p93 = scmp.ne.s32.totalorder %s84, %s85
    %p94 = scmp.eq.s32.totalorder %s18, 0
    %p95 = por %p93, %p94
    %p96 = scmp.ne.s32.totalorder %s84, %s85
    %p97 = scmp.eq.s32.totalorder %s19, 1
    %p98 = por %p96, %p97
    %p100 = scmp.ne.s32.totalorder %s85, %s99
    %p101 = scmp.eq.s32.totalorder %s19, 0
    %p102 = por %p100, %p101
    %s103 = ssub.s32 %s20, %s32
    %s104 = ssub.s32 %s21, %s28
    %s105 = sor.u32 %s103, %s104
    %p106 = scmp.eq.s32.totalorder %s105, 0
    %s108 = sadd.s32 %s107, 1
    %s109 = scalar_select %p106, %s107, %s108
    %p112 = pneg %p106
    %p113 = scmp.eq.s32.totalorder %s13, 1
    %p114 = por %p112, %p113
    %p115 = scmp.ne.s32.totalorder %s107, %s110
    %p116 = scmp.eq.s32.totalorder %s13, 0
    %p117 = por %p115, %p116
    %p118 = scmp.ne.s32.totalorder %s107, %s110
    %p119 = scmp.eq.s32.totalorder %s18, 1
    %p120 = por %p118, %p119
    %p121 = scmp.ne.s32.totalorder %s110, %s111
    %p122 = scmp.eq.s32.totalorder %s18, 0
    %p123 = por %p121, %p122
    %p124 = scmp.ne.s32.totalorder %s110, %s111
    %p125 = scmp.eq.s32.totalorder %s19, 1
    %p126 = por %p124, %p125
    %p128 = scmp.ne.s32.totalorder %s111, %s127
    %p129 = scmp.eq.s32.totalorder %s19, 0
    %p130 = por %p128, %p129
    %s131 = ssub.s32 %s20, %s32
    %s132 = ssub.s32 %s21, %s28
    %s133 = sor.u32 %s131, %s132
    %p134 = scmp.eq.s32.totalorder %s133, 0
    %s136 = sadd.s32 %s135, 1
    %s137 = scalar_select %p134, %s135, %s136
    %p140 = pneg %p134
    %p141 = scmp.eq.s32.totalorder %s13, 1
    %p142 = por %p140, %p141
    %p143 = scmp.ne.s32.totalorder %s135, %s138
    %p144 = scmp.eq.s32.totalorder %s13, 0
    %p145 = por %p143, %p144
    %p146 = scmp.ne.s32.totalorder %s135, %s138
    %p147 = scmp.eq.s32.totalorder %s18, 1
    %p148 = por %p146, %p147
    %p149 = scmp.ne.s32.totalorder %s138, %s139
    %p150 = scmp.eq.s32.totalorder %s18, 0
    %p151 = por %p149, %p150
    %p152 = scmp.ne.s32.totalorder %s138, %s139
    %p153 = scmp.eq.s32.totalorder %s19, 1
    %p154 = por %p152, %p153
    %p156 = scmp.ne.s32.totalorder %s139, %s155
    %p157 = scmp.eq.s32.totalorder %s19, 0
    %p158 = por %p156, %p157
    %s159 = ssub.s32 %s20, %s32
    %s160 = ssub.s32 %s21, %s28
    %s161 = sor.u32 %s159, %s160
    %p162 = scmp.eq.s32.totalorder %s161, 0
    %s164 = sadd.s32 %s163, 1
    %s165 = scalar_select %p162, %s163, %s164
    %p168 = pneg %p162
    %p169 = scmp.eq.s32.totalorder %s13, 1
    %p170 = por %p168, %p169
    %p171 = scmp.ne.s32.totalorder %s163, %s166
    %p172 = scmp.eq.s32.totalorder %s13, 0
    %p173 = por %p171, %p172
    %p174 = scmp.ne.s32.totalorder %s163, %s166
    %p175 = scmp.eq.s32.totalorder %s18, 1
    %p176 = por %p174, %p175
    %p177 = scmp.ne.s32.totalorder %s166, %s167
    %p178 = scmp.eq.s32.totalorder %s18, 0
    %p179 = por %p177, %p178
    %p180 = scmp.ne.s32.totalorder %s166, %s167
    %p181 = scmp.eq.s32.totalorder %s19, 1
    %p182 = por %p180, %p181
    %p184 = scmp.ne.s32.totalorder %s167, %s183
    %p185 = scmp.eq.s32.totalorder %s19, 0
    %p186 = por %p184, %p185
    %s187 = ssub.s32 %s20, %s32
    %s188 = ssub.s32 %s21, %s28
    %s189 = sor.u32 %s187, %s188
    %p190 = scmp.eq.s32.totalorder %s189, 0
    %s192 = sadd.s32 %s191, 1
    %s193 = scalar_select %p190, %s191, %s192
    %p196 = pneg %p190
    %p197 = scmp.eq.s32.totalorder %s13, 1
    %p198 = por %p196, %p197
    %p199 = scmp.ne.s32.totalorder %s191, %s194
    %p200 = scmp.eq.s32.totalorder %s13, 0
    %p201 = por %p199, %p200
    %p202 = scmp.ne.s32.totalorder %s191, %s194
    %p203 = scmp.eq.s32.totalorder %s18, 1
    %p204 = por %p202, %p203
    %p205 = scmp.ne.s32.totalorder %s194, %s195
    %p206 = scmp.eq.s32.totalorder %s18, 0
    %p207 = por %p205, %p206
    %p208 = scmp.ne.s32.totalorder %s194, %s195
    %p209 = scmp.eq.s32.totalorder %s19, 1
    %p210 = por %p208, %p209
    %p212 = scmp.ne.s32.totalorder %s195, %s211
    %p213 = scmp.eq.s32.totalorder %s19, 0
    %p214 = por %p212, %p213
    %p215 = scmp.le.s32.totalorder 1, %s13
    %p216 = scmp.lt.s32.totalorder %s13, 3
    %p217 = pnand %p215, %p216
    %p218 = pneg %p217
    // Predicated region
    $region9: #{_lambda_.1} parent=5 // pred_check
      _
    $region10: #{_lambda_.1} parent=5 // pred_check_branch
      %220 = sbr.rel (%p217) target = $region12
    $region11: #{_lambda_.1} parent=5 // pred_region
      %s221 = ssub.s32 %s13, 1
      // Predicated region
      $region13: #{_lambda_.1} parent=11 // pred_check
        %p222 = pneg %p74
      $region14: #{_lambda_.1} parent=11 // pred_check_branch
        %224 = sbr.rel (%p222) target = $region16
      $region15: #{_lambda_.1} parent=11 // pred_region
        _
      $region16: #{_lambda_.1} parent=11 // pred_fallthru
        _
      // Predicated region
      $region17: #{_lambda_.1} parent=11 // pred_check
        %p225 = pneg %p95
      $region18: #{_lambda_.1} parent=11 // pred_check_branch
        %227 = sbr.rel (%p225) target = $region20
      $region19: #{_lambda_.1} parent=11 // pred_region
        _
      $region20: #{_lambda_.1} parent=11 // pred_fallthru
        _
    $region12: #{_lambda_.1} parent=5 // pred_fallthru
      _
    %p228 = scmp.lt.s32.totalorder %s13, 2
    // Predicated region
    $region21: #{_lambda_.1} parent=5 // pred_check
      %p229 = pneg %p228
    $region22: #{_lambda_.1} parent=5 // pred_check_branch
      %231 = sbr.rel (%p229) target = $region24
    $region23: #{_lambda_.1} parent=5 // pred_region
      // Predicated region
      $region25: #{_lambda_.1} parent=23 // pred_check
        %p232 = pneg %p47
      $region26: #{_lambda_.1} parent=23 // pred_check_branch
        %234 = sbr.rel (%p232) target = $region28
      $region27: #{_lambda_.1} parent=23 // pred_region
        %s235 = smul.u32 2, %s21
        %p236 = scmp.lt.s32.totalorder %s20, 1
        %s237 = scalar_select %p236, %s20, 1
        %p238 = scmp.lt.s32.totalorder %s235, 1
        %s239 = scalar_select %p238, %s235, 1
        %s240 = smul.addr %s237, 2
        %s241 = sadd.s32 %s239, %s240
        %s242 = smul.addr %s241, 4
        %s243 = scalar_lea.vmem %s0, %s242
        %s244 = smul.u32 2, %s21
      $region28: #{_lambda_.1} parent=23 // pred_fallthru
        _
    $region24: #{_lambda_.1} parent=5 // pred_fallthru
      _
    %p245 = scmp.le.s32.totalorder 1, %s13
    %p246 = scmp.lt.s32.totalorder %s13, 3
    %p247 = pnand %p245, %p246
    %p248 = pneg %p247
    // Predicated region
    $region29: #{_lambda_.1} parent=5 // pred_check
      _
    $region30: #{_lambda_.1} parent=5 // pred_check_branch
      %250 = sbr.rel (%p247) target = $region32
    $region31: #{_lambda_.1} parent=5 // pred_region
      %s251 = ssub.s32 %s13, 1
      %s252 = smul.u32 2, %s23
      %p253 = scmp.lt.s32.totalorder %s22, 1
      %s254 = scalar_select %p253, %s22, 1
      %p255 = scmp.lt.s32.totalorder %s252, 1
      %s256 = scalar_select %p255, %s252, 1
      %s257 = smul.addr %s254, 2
      %s258 = sadd.s32 %s256, %s257
      %s259 = smul.addr %s258, 4
      %s260 = scalar_lea.vmem %s0, %s259
      %p261 = pneg %p53
      %p262 = pneg %p50
      %p263 = pneg %p74
      %p264 = pneg %p71
      %p265 = pneg %p95
      %p266 = pneg %p92
      %p267 = pneg %p123
      %p268 = pneg %p120
      %s269 = smul.u32 2, %s23
      %p270 = scmp.lt.s32.totalorder %s22, 1
      %s271 = scalar_select %p270, %s22, 1
      %p272 = scmp.lt.s32.totalorder %s269, 1
      %s273 = scalar_select %p272, %s269, 1
      %s274 = smul.addr %s271, 2
      %s275 = sadd.s32 %s273, %s274
      %s276 = smul.addr %s275, 4
      %s277 = scalar_lea.vmem %s3, %s276
      %p278 = pneg %p151
      %p279 = pneg %p148
      %s280 = smul.u32 2, %s23
      %p281 = scmp.lt.s32.totalorder %s22, 1
      %s282 = scalar_select %p281, %s22, 1
      %p283 = scmp.lt.s32.totalorder %s280, 1
      %s284 = scalar_select %p283, %s280, 1
      %s285 = smul.addr %s282, 2
      %s286 = sadd.s32 %s284, %s285
      %s287 = smul.addr %s286, 8
      %s288 = scalar_lea.vmem %s4, %s287
      %p289 = pneg %p179
      %p290 = pneg %p176
      %s291 = smul.u32 2, %s23
      %p292 = scmp.lt.s32.totalorder %s22, 1
      %s293 = scalar_select %p292, %s22, 1
      %p294 = scmp.lt.s32.totalorder %s291, 1
      %s295 = scalar_select %p294, %s291, 1
      %s296 = smul.addr %s293, 2
      %s297 = sadd.s32 %s295, %s296
      %s298 = smul.addr %s297, 4
      %s299 = scalar_lea.vmem %s5, %s298
      %p300 = pneg %p207
      %p301 = pneg %p204
      %s302 = smul.u32 2, %s23
      %p303 = scmp.lt.s32.totalorder %s22, 1
      %s304 = scalar_select %p303, %s22, 1
      %p305 = scmp.lt.s32.totalorder %s302, 1
      %s306 = scalar_select %p305, %s302, 1
      %s307 = smul.addr %s304, 2
      %s308 = sadd.s32 %s306, %s307
      %s309 = smul.addr %s308, 4
      %s310 = scalar_lea.vmem %s6, %s309
      %s311 = smul.u32 2, %s23
      %p312 = scmp.lt.s32.totalorder %s22, 1
      %s313 = scalar_select %p312, %s22, 1
      %p314 = scmp.lt.s32.totalorder %s311, 1
      %s315 = scalar_select %p314, %s311, 1
      %s316 = smul.addr %s313, 2
      %s317 = sadd.s32 %s315, %s316
      %s318 = smul.addr %s317, 4
      %s319 = scalar_lea.vmem %s0, %s318
      %s320 = smul.u32 2, %s23
      %s321 = smul.u32 2, %s23
      %p322 = scmp.lt.s32.totalorder %s22, 1
      %s323 = scalar_select %p322, %s22, 1
      %p324 = scmp.lt.s32.totalorder %s321, 1
      %s325 = scalar_select %p324, %s321, 1
      %s326 = smul.addr %s323, 2
      %s327 = sadd.s32 %s325, %s326
      %s328 = smul.addr %s327, 4
      %s329 = scalar_lea.vmem %s3, %s328
      %s330 = smul.u32 2, %s23
      %s331 = smul.u32 2, %s23
      %p332 = scmp.lt.s32.totalorder %s22, 1
      %s333 = scalar_select %p332, %s22, 1
      %p334 = scmp.lt.s32.totalorder %s331, 1
      %s335 = scalar_select %p334, %s331, 1
      %s336 = smul.addr %s333, 2
      %s337 = sadd.s32 %s335, %s336
      %s338 = smul.addr %s337, 8
      %s339 = scalar_lea.vmem %s4, %s338
      %s340 = smul.u32 2, %s23
      %s341 = smul.u32 2, %s23
      %p342 = scmp.lt.s32.totalorder %s22, 1
      %s343 = scalar_select %p342, %s22, 1
      %p344 = scmp.lt.s32.totalorder %s341, 1
      %s345 = scalar_select %p344, %s341, 1
      %s346 = smul.addr %s343, 2
      %s347 = sadd.s32 %s345, %s346
      %s348 = smul.addr %s347, 4
      %s349 = scalar_lea.vmem %s5, %s348
      %s350 = smul.u32 2, %s23
      %s351 = smul.u32 2, %s23
      %p352 = scmp.lt.s32.totalorder %s22, 1
      %s353 = scalar_select %p352, %s22, 1
      %p354 = scmp.lt.s32.totalorder %s351, 1
      %s355 = scalar_select %p354, %s351, 1
      %s356 = smul.addr %s353, 2
      %s357 = sadd.s32 %s355, %s356
      %s358 = smul.addr %s357, 4
      %s359 = scalar_lea.vmem %s6, %s358
      %s360 = smul.u32 2, %s23
      %v362 = vld [vmem:[%s319] sm:$0xff]
      %v363 = vld [vmem:[%s1] sm:$0xf]
      %v364 = vld [vmem:[%s1 + $0x4] sm:$0xf]
      %v365 = vld [vmem:[%s1 + $0x8] sm:$0xf]
      %v366 = vld [vmem:[%s1 + $0xc] sm:$0xf]
      %v367 = vld [vmem:[%s2] sm:$0xff]
      %v368 = vld [vmem:[%s2 + $0x8] sm:$0xff]
      %v369 = vld [vmem:[%s2 + $0x10] sm:$0xff]
      %v370 = vld [vmem:[%s2 + $0x18] sm:$0xff]
      %372 = vset.pattern.permute.xlu0 0
      %373 = vperm.xlu0 %372, %v367
      %v374 = vpop.permute.xlu0 %373
      %377 = vset.pattern.permute.xlu0 0
      %378 = vperm.xlu0 %377, %v368
      %v379 = vpop.permute.xlu0 %378
      %382 = vset.pattern.permute.xlu0 0
      %383 = vperm.xlu0 %382, %v369
      %v384 = vpop.permute.xlu0 %383
      %387 = vset.pattern.permute.xlu0 0
      %388 = vperm.xlu0 %387, %v370
      %v389 = vpop.permute.xlu0 %388
      %v395 = vunpack.c.l.b16 %v363
      %v396 = vunpack.c.l.b16 %v364
      %v397 = vunpack.c.l.b16 %v365
      %v398 = vunpack.c.l.b16 %v366
      %v399 = vpack.c.b16 %v396, %v395
      %v400 = vpack.c.b16 %v398, %v397
      %v402 = vunpack.c.l.b16 %v362
      %v403 = vunpack.c.h.b16 %v362
      %v404 = vpack.c.b16 %v402, %v402
      %v405 = vpack.c.b16 %v403, %v403
      %vm406 = vcmask 64512
      %v408 = vsel %vm406, %v399, 0
      %v411 = vsel %vm406, %v400, 0
      %vm413 = vcmask 1043456
      %v415 = vsel %vm413, %v404, 0
      %v418 = vsel %vm413, %v405, 0
      %420 = vmatprep.subr.bf16.mxu0 0
      %421 = vmatpush1.bf16.msra.mxu0 0
      %422 = vmatprep.subr.bf16.mxu0 0
      %423 = vmatpush1.bf16.msra.mxu0 0
      %424 = vmatprep.subr.bf16.mxu0 0
      %425 = vmatpush1.bf16.msra.mxu0 0
      %426 = vmatprep.subr.bf16.mxu0 0
      %427 = vmatpush1.bf16.msra.mxu0 0
      %428 = vmatprep.subr.bf16.mxu0 0
      %429 = vmatpush1.bf16.msra.mxu0 0
      %430 = vmatprep.subr.bf16.mxu0 0
      %431 = vmatpush1.bf16.msra.mxu0 0
      %432 = vmatprep.subr.bf16.mxu0 0
      %433 = vmatpush1.bf16.msra.mxu0 0
      %434 = vmatprep.subr.bf16.mxu0 %v418
      %435 = vmatpush1.bf16.msra.mxu0 %v415
      %436 = vmatprep.subr.bf16.mxu0 0
      %437 = vmatpush2.bf16.msra.mxu0 0
      %438 = vmatprep.subr.bf16.mxu0 0
      %439 = vmatpush2.bf16.msra.mxu0 0
      %440 = vmatprep.subr.bf16.mxu0 0
      %441 = vmatpush2.bf16.msra.mxu0 0
      %442 = vmatprep.subr.bf16.mxu0 0
      %443 = vmatpush2.bf16.msra.mxu0 0
      %444 = vmatprep.subr.bf16.mxu0 0
      %445 = vmatpush2.bf16.msra.mxu0 0
      %446 = vmatprep.subr.bf16.mxu0 0
      %447 = vmatpush2.bf16.msra.mxu0 0
      %448 = vmatprep.subr.bf16.mxu0 0
      %449 = vmatpush2.bf16.msra.mxu0 0
      %450 = vmatprep.subr.bf16.mxu0 0
      %451 = vmatpush2.bf16.msra.mxu0 0
      %452 = vmatprep.mubr.bf16.mxu0 0
      %453 = vmatmul.mubr.bf16.gmra.mxu0 %v408
      %v454 = vpop.f32.mrf.mxu0
      %v455 = vadd.f32 %v374, %v454
      %v456 = vpop.f32.mrf.mxu0
      %v457 = vadd.f32 %v374, %v456
      %v458 = vpop.f32.mrf.mxu0
      %v459 = vadd.f32 %v379, %v458
      %v460 = vpop.f32.mrf.mxu0
      %v461 = vadd.f32 %v379, %v460
      %462 = vmatprep.mubr.bf16.mxu0 0
      %463 = vmatmul.mubr.bf16.gmra.mxu0 %v411
      %v464 = vpop.f32.mrf.mxu0
      %v465 = vadd.f32 %v384, %v464
      %v466 = vpop.f32.mrf.mxu0
      %v467 = vadd.f32 %v384, %v466
      %v468 = vpop.f32.mrf.mxu0
      %v469 = vadd.f32 %v389, %v468
      %v470 = vpop.f32.mrf.mxu0
      %v471 = vadd.f32 %v389, %v470
      %472 = vdwg.mxu0
      %v473 = vxor.u32 %v455, 2147483648
      %v474 = vxor.u32 %v457, 2147483648
      %v475 = vmul.f32 %v473, 1.442695
      %v476 = vpow.pop %v475
      %v477 = vmul.f32 %v474, 1.442695
      %v478 = vpow.pop %v477
      %v479 = vadd.f32 %v476, 1.0
      %v480 = vadd.f32 %v478, 1.0
      %v481 = vrcp.pop %v479
      %v482 = vmul.f32 1.0, %v481
      %v483 = vrcp.pop %v480
      %v484 = vmul.f32 1.0, %v483
      %v487 = vcombine.low %v482, %v484
      %489 = vst [vmem:[%s329] sm:$0xff] %v487
      %490 = vst [vmem:[%s339] sm:$0xff] %v459
      %491 = vst [vmem:[%s339 + $0x8] sm:$0xff] %v461
      %v492 = vadd.f32 %v465, 2.0
      %v493 = vadd.f32 %v467, 2.0
      %vm494 = vcmp.ge.f32.partialorder %v492, 0.0
      %vm495 = vcmp.ge.f32.partialorder %v493, 0.0
      %v496 = vmul.f32 %v492, 0.01
      %v497 = vmul.f32 %v493, 0.01
      %v498 = vsel %vm494, %v492, %v496
      %v499 = vsel %vm495, %v493, %v497
      %v500 = vsub.f32 %v498, 2.0
      %v501 = vsub.f32 %v499, 2.0
      %v504 = vcombine.low %v500, %v501
      %506 = vst [vmem:[%s349] sm:$0xff] %v504
      %v507 = vmax.f32 %v469, 0.0
      %v508 = vmax.f32 %v471, 0.0
      %v511 = vcombine.low %v507, %v508
      %513 = vst [vmem:[%s359] sm:$0xff] %v511
      %s514 = smul.u32 2, %s23
      %p515 = scmp.lt.s32.totalorder %s22, 1
      %s516 = scalar_select %p515, %s22, 1
      %p517 = scmp.lt.s32.totalorder %s514, 1
      %s518 = scalar_select %p517, %s514, 1
      %s519 = smul.addr %s516, 2
      %s520 = sadd.s32 %s518, %s519
      %s521 = smul.addr %s520, 4
      %s522 = scalar_lea.vmem %s3, %s521
      %s523 = smul.u32 2, %s23
      %p524 = scmp.lt.s32.totalorder %s22, 1
      %s525 = scalar_select %p524, %s22, 1
      %p526 = scmp.lt.s32.totalorder %s523, 1
      %s527 = scalar_select %p526, %s523, 1
      %s528 = smul.addr %s525, 2
      %s529 = sadd.s32 %s527, %s528
      %s530 = smul.addr %s529, 8
      %s531 = scalar_lea.vmem %s4, %s530
      %s532 = smul.u32 2, %s23
      %p533 = scmp.lt.s32.totalorder %s22, 1
      %s534 = scalar_select %p533, %s22, 1
      %p535 = scmp.lt.s32.totalorder %s532, 1
      %s536 = scalar_select %p535, %s532, 1
      %s537 = smul.addr %s534, 2
      %s538 = sadd.s32 %s536, %s537
      %s539 = smul.addr %s538, 4
      %s540 = scalar_lea.vmem %s5, %s539
      %s541 = smul.u32 2, %s23
      %p542 = scmp.lt.s32.totalorder %s22, 1
      %s543 = scalar_select %p542, %s22, 1
      %p544 = scmp.lt.s32.totalorder %s541, 1
      %s545 = scalar_select %p544, %s541, 1
      %s546 = smul.addr %s543, 2
      %s547 = sadd.s32 %s545, %s546
      %s548 = smul.addr %s547, 4
      %s549 = scalar_lea.vmem %s6, %s548
      // Predicated region
      $region33: #{_lambda_.1} parent=31 // pred_check
        %p550 = pneg %p120
      $region34: #{_lambda_.1} parent=31 // pred_check_branch
        %552 = sbr.rel (%p550) target = $region36
      $region35: #{_lambda_.1} parent=31 // pred_region
        %s553 = smul.u32 2, %s23
      $region36: #{_lambda_.1} parent=31 // pred_fallthru
        _
      // Predicated region
      $region37: #{_lambda_.1} parent=31 // pred_check
        %p554 = pneg %p148
      $region38: #{_lambda_.1} parent=31 // pred_check_branch
        %556 = sbr.rel (%p554) target = $region40
      $region39: #{_lambda_.1} parent=31 // pred_region
        %s557 = smul.u32 2, %s23
      $region40: #{_lambda_.1} parent=31 // pred_fallthru
        _
      // Predicated region
      $region41: #{_lambda_.1} parent=31 // pred_check
        %p558 = pneg %p176
      $region42: #{_lambda_.1} parent=31 // pred_check_branch
        %560 = sbr.rel (%p558) target = $region44
      $region43: #{_lambda_.1} parent=31 // pred_region
        %s561 = smul.u32 2, %s23
      $region44: #{_lambda_.1} parent=31 // pred_fallthru
        _
      // Predicated region
      $region45: #{_lambda_.1} parent=31 // pred_check
        %p562 = pneg %p204
      $region46: #{_lambda_.1} parent=31 // pred_check_branch
        %564 = sbr.rel (%p562) target = $region48
      $region47: #{_lambda_.1} parent=31 // pred_region
        %s565 = smul.u32 2, %s23
      $region48: #{_lambda_.1} parent=31 // pred_fallthru
        _
    $region32: #{_lambda_.1} parent=5 // pred_fallthru
      _
    %p566 = scmp.le.s32.totalorder 2, %s13
    // Predicated region
    $region49: #{_lambda_.1} parent=5 // pred_check
      %p567 = pneg %p566
    $region50: #{_lambda_.1} parent=5 // pred_check_branch
      %569 = sbr.rel (%p567) target = $region52
    $region51: #{_lambda_.1} parent=5 // pred_region
      %s570 = ssub.s32 %s13, 2
      // Predicated region
      $region53: #{_lambda_.1} parent=51 // pred_check
        %p571 = pneg %p126
      $region54: #{_lambda_.1} parent=51 // pred_check_branch
        %573 = sbr.rel (%p571) target = $region56
      $region55: #{_lambda_.1} parent=51 // pred_region
        %s574 = smul.u32 2, %s25
        %p575 = scmp.lt.s32.totalorder %s24, 1
        %s576 = scalar_select %p575, %s24, 1
        %p577 = scmp.lt.s32.totalorder %s574, 1
        %s578 = scalar_select %p577, %s574, 1
        %s579 = smul.addr %s576, 2
        %s580 = sadd.s32 %s578, %s579
        %s581 = smul.addr %s580, 4
        %s582 = scalar_lea.vmem %s3, %s581
      $region56: #{_lambda_.1} parent=51 // pred_fallthru
        _
      // Predicated region
      $region57: #{_lambda_.1} parent=51 // pred_check
        %p583 = pneg %p154
      $region58: #{_lambda_.1} parent=51 // pred_check_branch
        %585 = sbr.rel (%p583) target = $region60
      $region59: #{_lambda_.1} parent=51 // pred_region
        %s586 = smul.u32 2, %s25
        %p587 = scmp.lt.s32.totalorder %s24, 1
        %s588 = scalar_select %p587, %s24, 1
        %p589 = scmp.lt.s32.totalorder %s586, 1
        %s590 = scalar_select %p589, %s586, 1
        %s591 = smul.addr %s588, 2
        %s592 = sadd.s32 %s590, %s591
        %s593 = smul.addr %s592, 8
        %s594 = scalar_lea.vmem %s4, %s593
      $region60: #{_lambda_.1} parent=51 // pred_fallthru
        _
      // Predicated region
      $region61: #{_lambda_.1} parent=51 // pred_check
        %p595 = pneg %p182
      $region62: #{_lambda_.1} parent=51 // pred_check_branch
        %597 = sbr.rel (%p595) target = $region64
      $region63: #{_lambda_.1} parent=51 // pred_region
        %s598 = smul.u32 2, %s25
        %p599 = scmp.lt.s32.totalorder %s24, 1
        %s600 = scalar_select %p599, %s24, 1
        %p601 = scmp.lt.s32.totalorder %s598, 1
        %s602 = scalar_select %p601, %s598, 1
        %s603 = smul.addr %s600, 2
        %s604 = sadd.s32 %s602, %s603
        %s605 = smul.addr %s604, 4
        %s606 = scalar_lea.vmem %s5, %s605
      $region64: #{_lambda_.1} parent=51 // pred_fallthru
        _
      // Predicated region
      $region65: #{_lambda_.1} parent=51 // pred_check
        %p607 = pneg %p210
      $region66: #{_lambda_.1} parent=51 // pred_check_branch
        %609 = sbr.rel (%p607) target = $region68
      $region67: #{_lambda_.1} parent=51 // pred_region
        %s610 = smul.u32 2, %s25
        %p611 = scmp.lt.s32.totalorder %s24, 1
        %s612 = scalar_select %p611, %s24, 1
        %p613 = scmp.lt.s32.totalorder %s610, 1
        %s614 = scalar_select %p613, %s610, 1
        %s615 = smul.addr %s612, 2
        %s616 = sadd.s32 %s614, %s615
        %s617 = smul.addr %s616, 4
        %s618 = scalar_lea.vmem %s6, %s617
      $region68: #{_lambda_.1} parent=51 // pred_fallthru
        _
    $region52: #{_lambda_.1} parent=5 // pred_fallthru
      _
  $region6: #{_lambda_.1} parent=0 // loop_footer
    %s17 = sadd.s32 1, %s13
  $region7: #{_lambda_.1} parent=0 // loop_footer_branch
    %12 = sbr.rel target = $region3
  $region8: #{_lambda_.1} parent=0 // loop_exit
    _

</llo_original>
